<compile_context>
chip_gen: v7x
topology: tpu7x:2x2x1
jax: 0.10.0
libtpu: 0.0.40
codegen_flags: <defaults>
</compile_context>

<pallas_src>
import jax
import jax.numpy as jnp
from jax.experimental import pallas as pl
from jax.experimental.pallas import tpu as pltpu


def _round_up(x, m):
    return (x + m - 1) // m * m


# ----------------------------- kernels --------------------------------------

def _mmdl_head_kernel(x1_ref, x2_ref,
                      w1_ref, b1_ref,
                      w2_ref, b2_ref,
                      wh1_ref, wh2_ref, bh_ref,
                      out_ref):
    """Encoders (Linear+ReLU) -> Concat fusion + Linear head (split-weight form)."""
    h1 = jnp.dot(x1_ref[...], w1_ref[...], preferred_element_type=jnp.float32)
    h1 = jnp.maximum(h1 + b1_ref[...], 0.0)
    h2 = jnp.dot(x2_ref[...], w2_ref[...], preferred_element_type=jnp.float32)
    h2 = jnp.maximum(h2 + b2_ref[...], 0.0)

    out = jnp.dot(h1.astype(wh1_ref.dtype), wh1_ref[...],
                  preferred_element_type=jnp.float32)
    out = out + jnp.dot(h2.astype(wh2_ref.dtype), wh2_ref[...],
                        preferred_element_type=jnp.float32)
    out_ref[...] = (out + bh_ref[...]).astype(out_ref.dtype)


def _mmdl_cca_kernel(x1_ref, x2_ref,
                     w1_ref, b1_ref,
                     w2_ref, b2_ref,
                     h1_ref, h2_ref):
    """cca=True path of MMDL.forward: return the encoder outputs only."""
    h1 = jnp.dot(x1_ref[...], w1_ref[...], preferred_element_type=jnp.float32)
    h1_ref[...] = jnp.maximum(h1 + b1_ref[...], 0.0).astype(h1_ref.dtype)
    h2 = jnp.dot(x2_ref[...], w2_ref[...], preferred_element_type=jnp.float32)
    h2_ref[...] = jnp.maximum(h2 + b2_ref[...], 0.0).astype(h2_ref.dtype)


# ------------------------ one-time parameter repack --------------------------

def prepare_mmdl_params(raw, *, lane=128, compute_dtype=jnp.float32):
    """One-time repack (do at init, NOT per call).

    - splits the concat-head weight wh into wh1/wh2 (no in-kernel lane concat,
      no per-call wrapper slice/copy)
    - zero-pads H and C up to a multiple of `lane` so every matmul / store is
      lane-dense.  Zero padding is bit-exact: padded hidden units are relu(0)=0
      and the corresponding zero rows of the head weight contribute nothing.
    - optionally casts weights to bf16 (fast MXU path on v6e/v7x); biases stay
      f32, accumulation is f32.
    """
    w1, b1 = raw["w1"], raw["b1"]
    w2, b2 = raw["w2"], raw["b2"]
    wh, bh = raw["wh"], raw["bh"]
    D1, H = w1.shape
    D2 = w2.shape[0]
    C = wh.shape[1]
    Hp = _round_up(H, lane)
    Cp = _round_up(C, lane)

    def pad2(a, shape):
        return jnp.zeros(shape, a.dtype).at[:a.shape[0], :a.shape[1]].set(a)

    params = {
        "w1": pad2(w1, (D1, Hp)).astype(compute_dtype),
        "b1": pad2(b1, (1, Hp)).astype(jnp.float32),
        "w2": pad2(w2, (D2, Hp)).astype(compute_dtype),
        "b2": pad2(b2, (1, Hp)).astype(jnp.float32),
        "wh1": pad2(wh[:H, :], (Hp, Cp)).astype(compute_dtype),
        "wh2": pad2(wh[H:, :], (Hp, Cp)).astype(compute_dtype),
        "bh": pad2(bh, (1, Cp)).astype(jnp.float32),
    }
    meta = {"D1": D1, "D2": D2, "H": H, "C": C, "Hp": Hp, "Cp": Cp,
            "compute_dtype": compute_dtype}
    return params, meta


# ------------------------------- wrapper --------------------------------------

def mmdl_forward(x1, x2, params, meta, cca=False, block_b=512):
    """MMDL forward.  x1: (B, D1), x2: (B, D2).

    Returns head output (B, C), or [h1, h2] encoder outputs if cca=True.
    """
    B = x1.shape[0]
    D1, D2 = meta["D1"], meta["D2"]
    Hp, Cp = meta["Hp"], meta["Cp"]
    H, C = meta["H"], meta["C"]
    cdt = meta["compute_dtype"]

    # Batch tile: multiple of 8 sublanes, capped at block_b rows per grid step.
    TB = min(block_b, _round_up(B, 8))
    Bp = _round_up(B, TB)
    n_b = Bp // TB

    x1p = x1.astype(cdt)
    x2p = x2.astype(cdt)
    if Bp != B:
        x1p = jnp.zeros((Bp, D1), cdt).at[:B].set(x1p)
        x2p = jnp.zeros((Bp, D2), cdt).at[:B].set(x2p)

    # Weights/biases: same block every grid step -> VMEM-resident, no re-DMA.
    def resident(a):
        return pl.BlockSpec(a.shape, lambda i: (0, 0))

    def batched(ncols):
        return pl.BlockSpec((TB, ncols), lambda i: (i, 0))

    enc_w_specs = [resident(params["w1"]), resident(params["b1"]),
                   resident(params["w2"]), resident(params["b2"])]

    cparams = pltpu.CompilerParams(
        dimension_semantics=("parallel",),          # megacore / 2-TC sharding
        vmem_limit_bytes=32 * 1024 * 1024,          # safe on v5e/v6e/v7x
    )

    if cca:
        h1, h2 = pl.pallas_call(
            _mmdl_cca_kernel,
            out_shape=(jax.ShapeDtypeStruct((Bp, Hp), jnp.float32),
                       jax.ShapeDtypeStruct((Bp, Hp), jnp.float32)),
            grid_spec=pltpu.PrefetchScalarGridSpec(
                num_scalar_prefetch=0,
                grid=(n_b,),
                in_specs=[batched(D1), batched(D2)] + enc_w_specs,
                out_specs=(batched(Hp), batched(Hp)),
            ),
            compiler_params=cparams,
        )(x1p, x2p, params["w1"], params["b1"], params["w2"], params["b2"])
        return [h1[:B, :H], h2[:B, :H]]

    out = pl.pallas_call(
        _mmdl_head_kernel,
        out_shape=jax.ShapeDtypeStruct((Bp, Cp), jnp.float32),
        grid_spec=pltpu.PrefetchScalarGridSpec(
            num_scalar_prefetch=0,
            grid=(n_b,),
            in_specs=[batched(D1), batched(D2)] + enc_w_specs +
                     [resident(params["wh1"]), resident(params["wh2"]),
                      resident(params["bh"])],
            out_specs=batched(Cp),
        ),
        compiler_params=cparams,
    )(x1p, x2p, params["w1"], params["b1"], params["w2"], params["b2"],
      params["wh1"], params["wh2"], params["bh"])
    return out[:B, :C]


# TODO(synk): the has_padding=True branch of MMDL.forward (encoders consuming
# [data, lengths]) is encoder-specific and not representable for this MLP
# instantiation; only the has_padding=False path is implemented.


# ------------------------------- self-check -----------------------------------

if __name__ == "__main__":
    key = jax.random.PRNGKey(0)
    k_x1, k_x2, k_w1, k_w2, k_wh = jax.random.split(key, 5)

    B, D1, D2, H, C = 2, 16, 32, 32, 8

    x1 = jax.random.normal(k_x1, (B, D1), dtype=jnp.float32)
    x2 = jax.random.normal(k_x2, (B, D2), dtype=jnp.float32)

    raw = {
        "w1": jax.random.normal(k_w1, (D1, H), dtype=jnp.float32) * 0.1,
        "b1": jnp.full((1, H), 0.05, dtype=jnp.float32),
        "w2": jax.random.normal(k_w2, (D2, H), dtype=jnp.float32) * 0.1,
        "b2": jnp.full((1, H), -0.05, dtype=jnp.float32),
        "wh": jax.random.normal(k_wh, (2 * H, C), dtype=jnp.float32) * 0.1,
        "bh": jnp.full((1, C), 0.01, dtype=jnp.float32),
    }

    # One-time parameter repack (pad/split), outside the hot path.
    # For v6e/v7x fast path use compute_dtype=jnp.bfloat16.
    params, meta = prepare_mmdl_params(raw, compute_dtype=jnp.float32)

    # cca=False path: head output only (no h1/h2 HBM writeback).
    out = mmdl_forward(x1, x2, params, meta, cca=False)
    jax.block_until_ready(out)

    # cca=True path: encoder outputs only.
    h1, h2 = mmdl_forward(x1, x2, params, meta, cca=True)
    jax.block_until_ready(h1)

    # Pure-JAX reference.
    ref_h1 = jnp.maximum(x1 @ raw["w1"] + raw["b1"], 0.0)
    ref_h2 = jnp.maximum(x2 @ raw["w2"] + raw["b2"], 0.0)
    ref_out = jnp.concatenate([ref_h1, ref_h2], axis=-1) @ raw["wh"] + raw["bh"]

    assert out.shape == (B, C)
    assert jnp.allclose(out, ref_out, atol=1e-5, rtol=1e-5), "head mismatch"
    assert jnp.allclose(h1, ref_h1, atol=1e-5, rtol=1e-5), "h1 mismatch"
    assert jnp.allclose(h2, ref_h2, atol=1e-5, rtol=1e-5), "h2 mismatch"
    print("KERNEL_OK")
</pallas_src>

<mosaic_0001>
module attributes {stable_mosaic.version = 11 : i64} {
  func.func @_mmdl_head_kernel(%arg0: i32, %arg1: memref<8x16xf32, #tpu.memory_space<vmem>>, %arg2: memref<8x32xf32, #tpu.memory_space<vmem>>, %arg3: memref<16x128xf32, #tpu.memory_space<vmem>>, %arg4: memref<1x128xf32, #tpu.memory_space<vmem>>, %arg5: memref<32x128xf32, #tpu.memory_space<vmem>>, %arg6: memref<1x128xf32, #tpu.memory_space<vmem>>, %arg7: memref<128x128xf32, #tpu.memory_space<vmem>>, %arg8: memref<128x128xf32, #tpu.memory_space<vmem>>, %arg9: memref<1x128xf32, #tpu.memory_space<vmem>>, %arg10: memref<8x128xf32, #tpu.memory_space<vmem>>) attributes {dimension_semantics = [#tpu.dimension_semantics<parallel>], iteration_bounds = array<i64: 1>, scalar_prefetch = 0 : i64, scratch_operands = 0 : i64, tpu.core_type = #tpu.core_type<tc>, window_params = [{transform_indices = @transform_0, window_bounds = array<i64: 8, 16>}, {transform_indices = @transform_1, window_bounds = array<i64: 8, 32>}, {pipeline_mode = #tpu.pipeline_mode<synchronous>, transform_indices = @transform_2, window_bounds = array<i64: 16, 128>}, {pipeline_mode = #tpu.pipeline_mode<synchronous>, transform_indices = @transform_3, window_bounds = array<i64: 1, 128>}, {pipeline_mode = #tpu.pipeline_mode<synchronous>, transform_indices = @transform_4, window_bounds = array<i64: 32, 128>}, {pipeline_mode = #tpu.pipeline_mode<synchronous>, transform_indices = @transform_5, window_bounds = array<i64: 1, 128>}, {pipeline_mode = #tpu.pipeline_mode<synchronous>, transform_indices = @transform_6, window_bounds = array<i64: 128, 128>}, {pipeline_mode = #tpu.pipeline_mode<synchronous>, transform_indices = @transform_7, window_bounds = array<i64: 128, 128>}, {pipeline_mode = #tpu.pipeline_mode<synchronous>, transform_indices = @transform_8, window_bounds = array<i64: 1, 128>}, {transform_indices = @transform_9, window_bounds = array<i64: 8, 128>}]} {
    %c0 = arith.constant 0 : index
    %c0_0 = arith.constant 0 : index
    %0 = vector.load %arg1[%c0, %c0_0] : memref<8x16xf32, #tpu.memory_space<vmem>>, vector<8x16xf32>
    %c0_1 = arith.constant 0 : index
    %c0_2 = arith.constant 0 : index
    %1 = vector.load %arg3[%c0_1, %c0_2] : memref<16x128xf32, #tpu.memory_space<vmem>>, vector<16x128xf32>
    %cst = arith.constant dense<0.000000e+00> : vector<8x128xf32>
    %2 = tpu.matmul %0, %1, %cst {dimension_numbers = #tpu.dot_dimension_numbers<[1], [0], [0], [1], [0, 0, 1, 1], [], []>} : vector<8x16xf32>, vector<16x128xf32>, vector<8x128xf32> -> vector<8x128xf32>
    %c0_3 = arith.constant 0 : index
    %c0_4 = arith.constant 0 : index
    %3 = vector.load %arg4[%c0_3, %c0_4] : memref<1x128xf32, #tpu.memory_space<vmem>>, vector<1x128xf32>
    %4 = vector.broadcast %3 : vector<1x128xf32> to vector<8x128xf32>
    %5 = arith.addf %2, %4 : vector<8x128xf32>
    %cst_5 = arith.constant 0.000000e+00 : f32
    %6 = vector.broadcast %cst_5 : f32 to vector<8x128xf32>
    %7 = arith.maximumf %5, %6 : vector<8x128xf32>
    %c0_6 = arith.constant 0 : index
    %c0_7 = arith.constant 0 : index
    %8 = vector.load %arg2[%c0_6, %c0_7] : memref<8x32xf32, #tpu.memory_space<vmem>>, vector<8x32xf32>
    %c0_8 = arith.constant 0 : index
    %c0_9 = arith.constant 0 : index
    %9 = vector.load %arg5[%c0_8, %c0_9] : memref<32x128xf32, #tpu.memory_space<vmem>>, vector<32x128xf32>
    %cst_10 = arith.constant dense<0.000000e+00> : vector<8x128xf32>
    %10 = tpu.matmul %8, %9, %cst_10 {dimension_numbers = #tpu.dot_dimension_numbers<[1], [0], [0], [1], [0, 0, 1, 1], [], []>} : vector<8x32xf32>, vector<32x128xf32>, vector<8x128xf32> -> vector<8x128xf32>
    %c0_11 = arith.constant 0 : index
    %c0_12 = arith.constant 0 : index
    %11 = vector.load %arg6[%c0_11, %c0_12] : memref<1x128xf32, #tpu.memory_space<vmem>>, vector<1x128xf32>
    %12 = vector.broadcast %11 : vector<1x128xf32> to vector<8x128xf32>
    %13 = arith.addf %10, %12 : vector<8x128xf32>
    %cst_13 = arith.constant 0.000000e+00 : f32
    %14 = vector.broadcast %cst_13 : f32 to vector<8x128xf32>
    %15 = arith.maximumf %13, %14 : vector<8x128xf32>
    %c0_14 = arith.constant 0 : index
    %c0_15 = arith.constant 0 : index
    %16 = vector.load %arg7[%c0_14, %c0_15] : memref<128x128xf32, #tpu.memory_space<vmem>>, vector<128x128xf32>
    %cst_16 = arith.constant dense<0.000000e+00> : vector<8x128xf32>
    %17 = tpu.matmul %7, %16, %cst_16 {dimension_numbers = #tpu.dot_dimension_numbers<[1], [0], [0], [1], [0, 0, 1, 1], [], []>} : vector<8x128xf32>, vector<128x128xf32>, vector<8x128xf32> -> vector<8x128xf32>
    %c0_17 = arith.constant 0 : index
    %c0_18 = arith.constant 0 : index
    %18 = vector.load %arg8[%c0_17, %c0_18] : memref<128x128xf32, #tpu.memory_space<vmem>>, vector<128x128xf32>
    %cst_19 = arith.constant dense<0.000000e+00> : vector<8x128xf32>
    %19 = tpu.matmul %15, %18, %cst_19 {dimension_numbers = #tpu.dot_dimension_numbers<[1], [0], [0], [1], [0, 0, 1, 1], [], []>} : vector<8x128xf32>, vector<128x128xf32>, vector<8x128xf32> -> vector<8x128xf32>
    %20 = arith.addf %17, %19 : vector<8x128xf32>
    %c0_20 = arith.constant 0 : index
    %c0_21 = arith.constant 0 : index
    %21 = vector.load %arg9[%c0_20, %c0_21] : memref<1x128xf32, #tpu.memory_space<vmem>>, vector<1x128xf32>
    %22 = vector.broadcast %21 : vector<1x128xf32> to vector<8x128xf32>
    %23 = arith.addf %20, %22 : vector<8x128xf32>
    %c0_22 = arith.constant 0 : index
    %c0_23 = arith.constant 0 : index
    %24 = vector.load %arg10[%c0_22, %c0_23] : memref<8x128xf32, #tpu.memory_space<vmem>>, vector<8x128xf32>
    tpu.vector_store %arg10[%c0_22, %c0_23], %23 {strides = array<i32>} : memref<8x128xf32, #tpu.memory_space<vmem>>, vector<8x128xf32>,
    return
  }
  func.func @transform_0(%arg0: i32) -> (i32, i32) {
    %c0_i32 = arith.constant 0 : i32
    %c0_i32_0 = arith.constant 0 : i32
    return %arg0, %c0_i32 : i32, i32
  }
  func.func @transform_1(%arg0: i32) -> (i32, i32) {
    %c0_i32 = arith.constant 0 : i32
    %c0_i32_0 = arith.constant 0 : i32
    return %arg0, %c0_i32 : i32, i32
  }
  func.func @transform_2(%arg0: i32) -> (i32, i32) {
    %c0_i32 = arith.constant 0 : i32
    %c0_i32_0 = arith.constant 0 : i32
    %c0_i32_1 = arith.constant 0 : i32
    return %c0_i32, %c0_i32_0 : i32, i32
  }
  func.func @transform_3(%arg0: i32) -> (i32, i32) {
    %c0_i32 = arith.constant 0 : i32
    %c0_i32_0 = arith.constant 0 : i32
    %c0_i32_1 = arith.constant 0 : i32
    return %c0_i32, %c0_i32_0 : i32, i32
  }
  func.func @transform_4(%arg0: i32) -> (i32, i32) {
    %c0_i32 = arith.constant 0 : i32
    %c0_i32_0 = arith.constant 0 : i32
    %c0_i32_1 = arith.constant 0 : i32
    return %c0_i32, %c0_i32_0 : i32, i32
  }
  func.func @transform_5(%arg0: i32) -> (i32, i32) {
    %c0_i32 = arith.constant 0 : i32
    %c0_i32_0 = arith.constant 0 : i32
    %c0_i32_1 = arith.constant 0 : i32
    return %c0_i32, %c0_i32_0 : i32, i32
  }
  func.func @transform_6(%arg0: i32) -> (i32, i32) {
    %c0_i32 = arith.constant 0 : i32
    %c0_i32_0 = arith.constant 0 : i32
    %c0_i32_1 = arith.constant 0 : i32
    return %c0_i32, %c0_i32_0 : i32, i32
  }
  func.func @transform_7(%arg0: i32) -> (i32, i32) {
    %c0_i32 = arith.constant 0 : i32
    %c0_i32_0 = arith.constant 0 : i32
    %c0_i32_1 = arith.constant 0 : i32
    return %c0_i32, %c0_i32_0 : i32, i32
  }
  func.func @transform_8(%arg0: i32) -> (i32, i32) {
    %c0_i32 = arith.constant 0 : i32
    %c0_i32_0 = arith.constant 0 : i32
    %c0_i32_1 = arith.constant 0 : i32
    return %c0_i32, %c0_i32_0 : i32, i32
  }
  func.func @transform_9(%arg0: i32) -> (i32, i32) {
    %c0_i32 = arith.constant 0 : i32
    %c0_i32_0 = arith.constant 0 : i32
    return %arg0, %c0_i32 : i32, i32
  }
}

</mosaic_0001>

<llo_original>
// kernel: tpu_custom_call.1
$region0: #{tpu_custom_call.1}
  #allocation0 [shape = 'u32[]', space=smem, size = 0x4, offset = 0x4, fixed_abs, tag = 'smem constant byte address 0x4 - core index']
  #allocation1 [shape = 'u32[144,128]{1,0:T(1,128)}', space=vmem, size = 0x12000, scoped, tag = 'internal scratch']
  %s0 = inlined_call_operand.hbm [shape: f32[8,16], index: 0, kind: input, shape index: {}]
  %s1 = inlined_call_operand.hbm [shape: f32[8,32], index: 1, kind: input, shape index: {}]
  %s2 = inlined_call_operand.hbm [shape: f32[16,128], index: 2, kind: input, shape index: {}]
  %s3 = inlined_call_operand.vmem [shape: f32[1,128], index: 3, kind: input, shape index: {}]
  %s4 = inlined_call_operand.hbm [shape: f32[32,128], index: 4, kind: input, shape index: {}]
  %s5 = inlined_call_operand.vmem [shape: f32[1,128], index: 5, kind: input, shape index: {}]
  %s6 = inlined_call_operand.hbm [shape: f32[128,128], index: 6, kind: input, shape index: {}]
  %s7 = inlined_call_operand.hbm [shape: f32[128,128], index: 7, kind: input, shape index: {}]
  %s8 = inlined_call_operand.vmem [shape: f32[1,128], index: 8, kind: input, shape index: {}]
  %s9 = inlined_call_operand.hbm [shape: f32[8,128], index: 9, kind: output, shape index: {}]
  %s10 = sld [smem:[#allocation0]]
  $region70: #{tpu_custom_call.1} parent=0
    _
  %s12 = ssub.s32 1, %s10
  %s13 = scalar_select 0, %s12, %s10
  $region1: #{tpu_custom_call.1} parent=0
    #allocation2 [shape = 'u8[4096]{0}', space=vmem, size = 0x1000, scoped, tag = 'input window, operand 0, single buffered']
    #allocation3 [shape = 's32[1]{0}', space=sflag, size = 0x4, scoped, tag = 'scoped memory for tpu_custom_call.1']
    #allocation4 [shape = 's32[1]{0}', space=sflag, size = 0x4, scoped, tag = 'scoped memory for tpu_custom_call.1']
    #allocation5 [shape = 'u8[4096]{0}', space=vmem, size = 0x1000, scoped, tag = 'input window, operand 1, single buffered']
    #allocation6 [shape = 's32[1]{0}', space=sflag, size = 0x4, scoped, tag = 'scoped memory for tpu_custom_call.1']
    #allocation7 [shape = 'u8[8192]{0}', space=vmem, size = 0x2000, scoped, tag = 'input window, operand 2, single buffered']
    #allocation8 [shape = 'u8[16384]{0}', space=vmem, size = 0x4000, scoped, tag = 'input window, operand 4, single buffered']
    #allocation9 [shape = 's32[1]{0}', space=sflag, size = 0x4, scoped, tag = 'scoped memory for tpu_custom_call.1']
    #allocation10 [shape = 'u8[65536]{0}', space=vmem, size = 0x10000, scoped, tag = 'input window, operand 6, single buffered']
    #allocation11 [shape = 'u8[65536]{0}', space=vmem, size = 0x10000, scoped, tag = 'input window, operand 7, single buffered']
    #allocation12 [shape = 's32[1]{0}', space=sflag, size = 0x4, scoped, tag = 'scoped memory for tpu_custom_call.1']
    #allocation13 [shape = 'u8[4096]{0}', space=vmem, size = 0x1000, scoped, tag = 'output window, operand 0, single buffered']
    %14 = vsyncpa [#allocation3], 0
    %15 = vsyncpa [#allocation6], 0
    %16 = vsyncpa [#allocation9], 0
    %17 = vsyncpa [#allocation12], 0
    %18 = vsyncpa [#allocation4], 0
    // Predicated region
    $region2: #{tpu_custom_call.1} parent=1 // pred_check
      _
    $region3: #{tpu_custom_call.1} parent=1 // pred_check_branch
      %20 = sbr.rel (0) target = $region5
    $region4: #{tpu_custom_call.1} parent=1 // pred_region
      %s22 = ssub.s32 128, 128
      %23 = vsyncadd [#allocation3], %s22
      %s25 = sshll.u32 [#allocation2], 4
      %s26 = int_to_ptr.vmem [resolvable:$true] %s25
      %28 = dma.hbm_to_vmem [thread:$0]  %s0, 128, %s26, [#allocation3]
    $region5: #{tpu_custom_call.1} parent=1 // pred_fallthru
      _
    // Predicated region
    $region6: #{tpu_custom_call.1} parent=1 // pred_check
      _
    $region7: #{tpu_custom_call.1} parent=1 // pred_check_branch
      %30 = sbr.rel (0) target = $region9
    $region8: #{tpu_custom_call.1} parent=1 // pred_region
      %s32 = ssub.s32 128, 128
      %33 = vsyncadd [#allocation6], %s32
      %s35 = sshll.u32 [#allocation5], 4
      %s36 = int_to_ptr.vmem [resolvable:$true] %s35
      %38 = dma.hbm_to_vmem [thread:$0]  %s1, 128, %s36, [#allocation6]
    $region9: #{tpu_custom_call.1} parent=1 // pred_fallthru
      _
    // Predicated region
    $region10: #{tpu_custom_call.1} parent=1 // pred_check
      _
    $region11: #{tpu_custom_call.1} parent=1 // pred_check_branch
      %40 = sbr.rel (0) target = $region13
    $region12: #{tpu_custom_call.1} parent=1 // pred_region
      %s42 = ssub.s32 256, 256
      %43 = vsyncadd [#allocation6], %s42
      %s44 = sshll.u32 [#allocation7], 4
      %s45 = int_to_ptr.vmem [resolvable:$true] %s44
      %50 = dma.hbm_to_vmem [thread:$0]  %s2, 256, %s45, [#allocation6], 128, 128, 8
    $region13: #{tpu_custom_call.1} parent=1 // pred_fallthru
      _
    // Predicated region
    $region14: #{tpu_custom_call.1} parent=1 // pred_check
      _
    $region15: #{tpu_custom_call.1} parent=1 // pred_check_branch
      %52 = sbr.rel (0) target = $region17
    $region16: #{tpu_custom_call.1} parent=1 // pred_region
      _
    $region17: #{tpu_custom_call.1} parent=1 // pred_fallthru
      _
    // Predicated region
    $region18: #{tpu_custom_call.1} parent=1 // pred_check
      _
    $region19: #{tpu_custom_call.1} parent=1 // pred_check_branch
      %54 = sbr.rel (0) target = $region21
    $region20: #{tpu_custom_call.1} parent=1 // pred_region
      %s56 = ssub.s32 512, 512
      %57 = vsyncadd [#allocation9], %s56
      %s58 = sshll.u32 [#allocation8], 4
      %s59 = int_to_ptr.vmem [resolvable:$true] %s58
      %64 = dma.hbm_to_vmem [thread:$0]  %s4, 512, %s59, [#allocation9], 128, 128, 8
    $region21: #{tpu_custom_call.1} parent=1 // pred_fallthru
      _
    // Predicated region
    $region22: #{tpu_custom_call.1} parent=1 // pred_check
      _
    $region23: #{tpu_custom_call.1} parent=1 // pred_check_branch
      %66 = sbr.rel (0) target = $region25
    $region24: #{tpu_custom_call.1} parent=1 // pred_region
      _
    $region25: #{tpu_custom_call.1} parent=1 // pred_fallthru
      _
    // Predicated region
    $region26: #{tpu_custom_call.1} parent=1 // pred_check
      _
    $region27: #{tpu_custom_call.1} parent=1 // pred_check_branch
      %68 = sbr.rel (0) target = $region29
    $region28: #{tpu_custom_call.1} parent=1 // pred_region
      %s70 = ssub.s32 2048, 2048
      %71 = vsyncadd [#allocation9], %s70
      %s72 = sshll.u32 [#allocation10], 4
      %s73 = int_to_ptr.vmem [resolvable:$true] %s72
      %78 = dma.hbm_to_vmem [thread:$0]  %s6, 2048, %s73, [#allocation9], 128, 128, 8
    $region29: #{tpu_custom_call.1} parent=1 // pred_fallthru
      _
    // Predicated region
    $region30: #{tpu_custom_call.1} parent=1 // pred_check
      _
    $region31: #{tpu_custom_call.1} parent=1 // pred_check_branch
      %80 = sbr.rel (0) target = $region33
    $region32: #{tpu_custom_call.1} parent=1 // pred_region
      %s82 = ssub.s32 2048, 2048
      %83 = vsyncadd [#allocation12], %s82
      %s84 = sshll.u32 [#allocation11], 4
      %s85 = int_to_ptr.vmem [resolvable:$true] %s84
      %90 = dma.hbm_to_vmem [thread:$0]  %s7, 2048, %s85, [#allocation12], 128, 128, 8
    $region33: #{tpu_custom_call.1} parent=1 // pred_fallthru
      _
    // Predicated region
    $region34: #{tpu_custom_call.1} parent=1 // pred_check
      _
    $region35: #{tpu_custom_call.1} parent=1 // pred_check_branch
      %92 = sbr.rel (0) target = $region37
    $region36: #{tpu_custom_call.1} parent=1 // pred_region
      _
    $region37: #{tpu_custom_call.1} parent=1 // pred_fallthru
      _
    // Predicated region
    $region38: #{tpu_custom_call.1} parent=1 // pred_check
      _
    $region39: #{tpu_custom_call.1} parent=1 // pred_check_branch
      %94 = sbr.rel (0) target = $region41
    $region40: #{tpu_custom_call.1} parent=1 // pred_region
      %95 = dma.done [#allocation3], 128
    $region41: #{tpu_custom_call.1} parent=1 // pred_fallthru
      _
    // Predicated region
    $region42: #{tpu_custom_call.1} parent=1 // pred_check
      _
    $region43: #{tpu_custom_call.1} parent=1 // pred_check_branch
      %97 = sbr.rel (0) target = $region45
    $region44: #{tpu_custom_call.1} parent=1 // pred_region
      %98 = dma.done [#allocation6], 128
    $region45: #{tpu_custom_call.1} parent=1 // pred_fallthru
      _
    // Predicated region
    $region46: #{tpu_custom_call.1} parent=1 // pred_check
      _
    $region47: #{tpu_custom_call.1} parent=1 // pred_check_branch
      %100 = sbr.rel (0) target = $region49
    $region48: #{tpu_custom_call.1} parent=1 // pred_region
      %101 = dma.done [#allocation6], 256
    $region49: #{tpu_custom_call.1} parent=1 // pred_fallthru
      _
    // Predicated region
    $region50: #{tpu_custom_call.1} parent=1 // pred_check
      _
    $region51: #{tpu_custom_call.1} parent=1 // pred_check_branch
      %103 = sbr.rel (0) target = $region53
    $region52: #{tpu_custom_call.1} parent=1 // pred_region
      %104 = dma.done [#allocation9], 512
    $region53: #{tpu_custom_call.1} parent=1 // pred_fallthru
      _
    // Predicated region
    $region54: #{tpu_custom_call.1} parent=1 // pred_check
      _
    $region55: #{tpu_custom_call.1} parent=1 // pred_check_branch
      %106 = sbr.rel (0) target = $region57
    $region56: #{tpu_custom_call.1} parent=1 // pred_region
      %107 = dma.done [#allocation9], 2048
    $region57: #{tpu_custom_call.1} parent=1 // pred_fallthru
      _
    // Predicated region
    $region58: #{tpu_custom_call.1} parent=1 // pred_check
      _
    $region59: #{tpu_custom_call.1} parent=1 // pred_check_branch
      %109 = sbr.rel (0) target = $region61
    $region60: #{tpu_custom_call.1} parent=1 // pred_region
      %110 = dma.done [#allocation12], 2048
    $region61: #{tpu_custom_call.1} parent=1 // pred_fallthru
      _
    %v111 = vld [vmem:[#allocation2] sm:$0xff]
    %v112 = vld [vmem:[#allocation7] sm:$0xff]
    %v113 = vld [vmem:[#allocation7 + $0x8] sm:$0xff]
    %v114 = vld [vmem:[%s3] sm:$0x1]
    %v116 = vlaneseq
    %v117 = vshrl.u32 %v116, 7
    %v118 = vsub.s32 0, %v117
    %v119 = vrot.slane %v114, %v118
    %vm121 = vcmask 130048
    %v123 = vsel %vm121, %v111, 0
    %125 = vmatprep.subr.mxu0 0.0
    %126 = vmatpush1.msra.mxu0 %v112
    %127 = vmatprep.subr.mxu0 0.0
    %128 = vmatpush1.msra.mxu0 %v113
    %129 = vmatprep.subr.mxu0 0.0
    %130 = vmatpush1.msra.mxu0 0.0
    %131 = vmatprep.subr.mxu0 0.0
    %132 = vmatpush1.msra.mxu0 0.0
    %133 = vmatprep.subr.mxu0 0.0
    %134 = vmatpush1.msra.mxu0 0.0
    %135 = vmatprep.subr.mxu0 0.0
    %136 = vmatpush1.msra.mxu0 0.0
    %137 = vmatprep.subr.mxu0 0.0
    %138 = vmatpush1.msra.mxu0 0.0
    %139 = vmatprep.subr.mxu0 0.0
    %140 = vmatpush1.msra.mxu0 0.0
    %141 = vmatprep.subr.mxu0 0.0
    %142 = vmatpush1.msra.mxu0 0.0
    %143 = vmatprep.subr.mxu0 0.0
    %144 = vmatpush1.msra.mxu0 0.0
    %145 = vmatprep.subr.mxu0 0.0
    %146 = vmatpush1.msra.mxu0 0.0
    %147 = vmatprep.subr.mxu0 0.0
    %148 = vmatpush1.msra.mxu0 0.0
    %149 = vmatprep.subr.mxu0 0.0
    %150 = vmatpush1.msra.mxu0 0.0
    %151 = vmatprep.subr.mxu0 0.0
    %152 = vmatpush1.msra.mxu0 0.0
    %153 = vmatprep.subr.mxu0 0.0
    %154 = vmatpush1.msra.mxu0 0.0
    %155 = vmatprep.subr.mxu0 0.0
    %156 = vmatpush1.msra.mxu0 0.0
    %157 = vmatprep.subr.mxu0 0.0
    %158 = vmatpush1.msra.mxu0 0.0
    %159 = vmatprep.subr.mxu0 0.0
    %160 = vmatpush1.msra.mxu0 0.0
    %161 = vmatprep.subr.mxu0 0.0
    %162 = vmatpush1.msra.mxu0 0.0
    %163 = vmatprep.subr.mxu0 0.0
    %164 = vmatpush1.msra.mxu0 0.0
    %165 = vmatprep.subr.mxu0 0.0
    %166 = vmatpush1.msra.mxu0 0.0
    %167 = vmatprep.subr.mxu0 0.0
    %168 = vmatpush1.msra.mxu0 0.0
    %169 = vmatprep.subr.mxu0 0.0
    %170 = vmatpush1.msra.mxu0 0.0
    %171 = vmatprep.subr.mxu0 0.0
    %172 = vmatpush1.msra.mxu0 0.0
    %173 = vmatprep.subr.mxu0 0.0
    %174 = vmatpush1.msra.mxu0 0.0
    %175 = vmatprep.subr.mxu0 0.0
    %176 = vmatpush1.msra.mxu0 0.0
    %177 = vmatprep.subr.mxu0 0.0
    %178 = vmatpush1.msra.mxu0 0.0
    %179 = vmatprep.subr.mxu0 0.0
    %180 = vmatpush1.msra.mxu0 0.0
    %181 = vmatprep.subr.mxu0 0.0
    %182 = vmatpush1.msra.mxu0 0.0
    %183 = vmatprep.subr.mxu0 0.0
    %184 = vmatpush1.msra.mxu0 0.0
    %185 = vmatprep.subr.mxu0 0.0
    %186 = vmatpush1.msra.mxu0 0.0
    %187 = vmatprep.subr.mxu0 0.0
    %188 = vmatpush1.msra.mxu0 0.0
    %189 = vmatprep.mubr.f32.mxu0 0.0
    %190 = vmatmul.mubr.f32.gmra.mrb[0].mxu0 %v123
    %v191 = vpop.f32.mrb[0].mxu0
    %v192 = vadd.f32 %v119, %v191
    %v193 = vpop.f32.mrb[0].mxu0
    %194 = vdwg.mxu0
    %v195 = vmax.f32 %v192, 0.0
    %v196 = vld [vmem:[#allocation5] sm:$0xff]
    %v197 = vld [vmem:[#allocation8] sm:$0xff]
    %v198 = vld [vmem:[#allocation8 + $0x8] sm:$0xff]
    %v199 = vld [vmem:[#allocation8 + $0x10] sm:$0xff]
    %v200 = vld [vmem:[#allocation8 + $0x18] sm:$0xff]
    %v201 = vld [vmem:[%s5] sm:$0x1]
    %v203 = vlaneseq
    %v204 = vshrl.u32 %v203, 7
    %v205 = vsub.s32 0, %v204
    %v206 = vrot.slane %v201, %v205
    %vm208 = vcmask 261120
    %v210 = vsel %vm208, %v196, 0
    %212 = vmatprep.subr.mxu0 0.0
    %213 = vmatpush1.msra.mxu0 %v197
    %214 = vmatprep.subr.mxu0 0.0
    %215 = vmatpush1.msra.mxu0 %v198
    %216 = vmatprep.subr.mxu0 0.0
    %217 = vmatpush1.msra.mxu0 %v199
    %218 = vmatprep.subr.mxu0 0.0
    %219 = vmatpush1.msra.mxu0 %v200
    %220 = vmatprep.subr.mxu0 0.0
    %221 = vmatpush1.msra.mxu0 0.0
    %222 = vmatprep.subr.mxu0 0.0
    %223 = vmatpush1.msra.mxu0 0.0
    %224 = vmatprep.subr.mxu0 0.0
    %225 = vmatpush1.msra.mxu0 0.0
    %226 = vmatprep.subr.mxu0 0.0
    %227 = vmatpush1.msra.mxu0 0.0
    %228 = vmatprep.subr.mxu0 0.0
    %229 = vmatpush1.msra.mxu0 0.0
    %230 = vmatprep.subr.mxu0 0.0
    %231 = vmatpush1.msra.mxu0 0.0
    %232 = vmatprep.subr.mxu0 0.0
    %233 = vmatpush1.msra.mxu0 0.0
    %234 = vmatprep.subr.mxu0 0.0
    %235 = vmatpush1.msra.mxu0 0.0
    %236 = vmatprep.subr.mxu0 0.0
    %237 = vmatpush1.msra.mxu0 0.0
    %238 = vmatprep.subr.mxu0 0.0
    %239 = vmatpush1.msra.mxu0 0.0
    %240 = vmatprep.subr.mxu0 0.0
    %241 = vmatpush1.msra.mxu0 0.0
    %242 = vmatprep.subr.mxu0 0.0
    %243 = vmatpush1.msra.mxu0 0.0
    %244 = vmatprep.subr.mxu0 0.0
    %245 = vmatpush1.msra.mxu0 0.0
    %246 = vmatprep.subr.mxu0 0.0
    %247 = vmatpush1.msra.mxu0 0.0
    %248 = vmatprep.subr.mxu0 0.0
    %249 = vmatpush1.msra.mxu0 0.0
    %250 = vmatprep.subr.mxu0 0.0
    %251 = vmatpush1.msra.mxu0 0.0
    %252 = vmatprep.subr.mxu0 0.0
    %253 = vmatpush1.msra.mxu0 0.0
    %254 = vmatprep.subr.mxu0 0.0
    %255 = vmatpush1.msra.mxu0 0.0
    %256 = vmatprep.subr.mxu0 0.0
    %257 = vmatpush1.msra.mxu0 0.0
    %258 = vmatprep.subr.mxu0 0.0
    %259 = vmatpush1.msra.mxu0 0.0
    %260 = vmatprep.subr.mxu0 0.0
    %261 = vmatpush1.msra.mxu0 0.0
    %262 = vmatprep.subr.mxu0 0.0
    %263 = vmatpush1.msra.mxu0 0.0
    %264 = vmatprep.subr.mxu0 0.0
    %265 = vmatpush1.msra.mxu0 0.0
    %266 = vmatprep.subr.mxu0 0.0
    %267 = vmatpush1.msra.mxu0 0.0
    %268 = vmatprep.subr.mxu0 0.0
    %269 = vmatpush1.msra.mxu0 0.0
    %270 = vmatprep.subr.mxu0 0.0
    %271 = vmatpush1.msra.mxu0 0.0
    %272 = vmatprep.subr.mxu0 0.0
    %273 = vmatpush1.msra.mxu0 0.0
    %274 = vmatprep.subr.mxu0 0.0
    %275 = vmatpush1.msra.mxu0 0.0
    %276 = vmatprep.mubr.f32.mxu0 0.0
    %277 = vmatmul.mubr.f32.gmra.mrb[0].mxu0 %v210
    %v278 = vpop.f32.mrb[0].mxu0
    %v279 = vadd.f32 %v206, %v278
    %v280 = vpop.f32.mrb[0].mxu0
    %281 = vdwg.mxu0
    %v282 = vmax.f32 %v279, 0.0
    %v283 = vld [vmem:[#allocation10] sm:$0xff]
    %v284 = vld [vmem:[#allocation10 + $0x8] sm:$0xff]
    %v285 = vld [vmem:[#allocation10 + $0x10] sm:$0xff]
    %v286 = vld [vmem:[#allocation10 + $0x18] sm:$0xff]
    %v287 = vld [vmem:[#allocation10 + $0x20] sm:$0xff]
    %v288 = vld [vmem:[#allocation10 + $0x28] sm:$0xff]
    %v289 = vld [vmem:[#allocation10 + $0x30] sm:$0xff]
    %v290 = vld [vmem:[#allocation10 + $0x38] sm:$0xff]
    %v291 = vld [vmem:[#allocation10 + $0x40] sm:$0xff]
    %v292 = vld [vmem:[#allocation10 + $0x48] sm:$0xff]
    %v293 = vld [vmem:[#allocation10 + $0x50] sm:$0xff]
    %v294 = vld [vmem:[#allocation10 + $0x58] sm:$0xff]
    %v295 = vld [vmem:[#allocation10 + $0x60] sm:$0xff]
    %v296 = vld [vmem:[#allocation10 + $0x68] sm:$0xff]
    %v297 = vld [vmem:[#allocation10 + $0x70] sm:$0xff]
    %v298 = vld [vmem:[#allocation10 + $0x78] sm:$0xff]
    %v299 = vld [vmem:[#allocation11] sm:$0xff]
    %v300 = vld [vmem:[#allocation11 + $0x8] sm:$0xff]
    %v301 = vld [vmem:[#allocation11 + $0x10] sm:$0xff]
    %v302 = vld [vmem:[#allocation11 + $0x18] sm:$0xff]
    %v303 = vld [vmem:[#allocation11 + $0x20] sm:$0xff]
    %v304 = vld [vmem:[#allocation11 + $0x28] sm:$0xff]
    %v305 = vld [vmem:[#allocation11 + $0x30] sm:$0xff]
    %v306 = vld [vmem:[#allocation11 + $0x38] sm:$0xff]
    %v307 = vld [vmem:[#allocation11 + $0x40] sm:$0xff]
    %v308 = vld [vmem:[#allocation11 + $0x48] sm:$0xff]
    %v309 = vld [vmem:[#allocation11 + $0x50] sm:$0xff]
    %v310 = vld [vmem:[#allocation11 + $0x58] sm:$0xff]
    %v311 = vld [vmem:[#allocation11 + $0x60] sm:$0xff]
    %v312 = vld [vmem:[#allocation11 + $0x68] sm:$0xff]
    %v313 = vld [vmem:[#allocation11 + $0x70] sm:$0xff]
    %v314 = vld [vmem:[#allocation11 + $0x78] sm:$0xff]
    %315 = vmatprep.subr.mxu0 0.0
    %316 = vmatpush1.msra.mxu0 %v299
    %317 = vmatprep.subr.mxu0 0.0
    %318 = vmatpush1.msra.mxu0 %v300
    %319 = vmatprep.subr.mxu0 0.0
    %320 = vmatpush1.msra.mxu0 %v301
    %321 = vmatprep.subr.mxu0 0.0
    %322 = vmatpush1.msra.mxu0 %v302
    %323 = vmatprep.subr.mxu0 0.0
    %324 = vmatpush1.msra.mxu0 %v303
    %325 = vmatprep.subr.mxu0 0.0
    %326 = vmatpush1.msra.mxu0 %v304
    %327 = vmatprep.subr.mxu0 0.0
    %328 = vmatpush1.msra.mxu0 %v305
    %329 = vmatprep.subr.mxu0 0.0
    %330 = vmatpush1.msra.mxu0 %v306
    %331 = vmatprep.subr.mxu0 0.0
    %332 = vmatpush1.msra.mxu0 %v307
    %333 = vmatprep.subr.mxu0 0.0
    %334 = vmatpush1.msra.mxu0 %v308
    %335 = vmatprep.subr.mxu0 0.0
    %336 = vmatpush1.msra.mxu0 %v309
    %337 = vmatprep.subr.mxu0 0.0
    %338 = vmatpush1.msra.mxu0 %v310
    %339 = vmatprep.subr.mxu0 0.0
    %340 = vmatpush1.msra.mxu0 %v311
    %341 = vmatprep.subr.mxu0 0.0
    %342 = vmatpush1.msra.mxu0 %v312
    %343 = vmatprep.subr.mxu0 0.0
    %344 = vmatpush1.msra.mxu0 %v313
    %345 = vmatprep.subr.mxu0 0.0
    %346 = vmatpush1.msra.mxu0 %v314
    %347 = vmatprep.subr.mxu0 0.0
    %348 = vmatpush1.msra.mxu0 0.0
    %349 = vmatprep.subr.mxu0 0.0
    %350 = vmatpush1.msra.mxu0 0.0
    %351 = vmatprep.subr.mxu0 0.0
    %352 = vmatpush1.msra.mxu0 0.0
    %353 = vmatprep.subr.mxu0 0.0
    %354 = vmatpush1.msra.mxu0 0.0
    %355 = vmatprep.subr.mxu0 0.0
    %356 = vmatpush1.msra.mxu0 0.0
    %357 = vmatprep.subr.mxu0 0.0
    %358 = vmatpush1.msra.mxu0 0.0
    %359 = vmatprep.subr.mxu0 0.0
    %360 = vmatpush1.msra.mxu0 0.0
    %361 = vmatprep.subr.mxu0 0.0
    %362 = vmatpush1.msra.mxu0 0.0
    %363 = vmatprep.subr.mxu0 0.0
    %364 = vmatpush1.msra.mxu0 0.0
    %365 = vmatprep.subr.mxu0 0.0
    %366 = vmatpush1.msra.mxu0 0.0
    %367 = vmatprep.subr.mxu0 0.0
    %368 = vmatpush1.msra.mxu0 0.0
    %369 = vmatprep.subr.mxu0 0.0
    %370 = vmatpush1.msra.mxu0 0.0
    %371 = vmatprep.subr.mxu0 0.0
    %372 = vmatpush1.msra.mxu0 0.0
    %373 = vmatprep.subr.mxu0 0.0
    %374 = vmatpush1.msra.mxu0 0.0
    %375 = vmatprep.subr.mxu0 0.0
    %376 = vmatpush1.msra.mxu0 0.0
    %377 = vmatprep.subr.mxu0 0.0
    %378 = vmatpush1.msra.mxu0 0.0
    %379 = vmatprep.mubr.f32.mxu0 0.0
    %380 = vmatmul.mubr.f32.gmra.mrb[0].mxu0 %v282
    %v381 = vpop.f32.mrb[0].mxu0
    %v382 = vadd.f32 0.0, %v381
    %v383 = vpop.f32.mrb[0].mxu0
    %384 = vdwg.mxu0
    %385 = vmatprep.subr.mxu0 0.0
    %386 = vmatpush1.msra.mxu0 %v283
    %387 = vmatprep.subr.mxu0 0.0
    %388 = vmatpush1.msra.mxu0 %v284
    %389 = vmatprep.subr.mxu0 0.0
    %390 = vmatpush1.msra.mxu0 %v285
    %391 = vmatprep.subr.mxu0 0.0
    %392 = vmatpush1.msra.mxu0 %v286
    %393 = vmatprep.subr.mxu0 0.0
    %394 = vmatpush1.msra.mxu0 %v287
    %395 = vmatprep.subr.mxu0 0.0
    %396 = vmatpush1.msra.mxu0 %v288
    %397 = vmatprep.subr.mxu0 0.0
    %398 = vmatpush1.msra.mxu0 %v289
    %399 = vmatprep.subr.mxu0 0.0
    %400 = vmatpush1.msra.mxu0 %v290
    %401 = vmatprep.subr.mxu0 0.0
    %402 = vmatpush1.msra.mxu0 %v291
    %403 = vmatprep.subr.mxu0 0.0
    %404 = vmatpush1.msra.mxu0 %v292
    %405 = vmatprep.subr.mxu0 0.0
    %406 = vmatpush1.msra.mxu0 %v293
    %407 = vmatprep.subr.mxu0 0.0
    %408 = vmatpush1.msra.mxu0 %v294
    %409 = vmatprep.subr.mxu0 0.0
    %410 = vmatpush1.msra.mxu0 %v295
    %411 = vmatprep.subr.mxu0 0.0
    %412 = vmatpush1.msra.mxu0 %v296
    %413 = vmatprep.subr.mxu0 0.0
    %414 = vmatpush1.msra.mxu0 %v297
    %415 = vmatprep.subr.mxu0 0.0
    %416 = vmatpush1.msra.mxu0 %v298
    %417 = vmatprep.subr.mxu0 0.0
    %418 = vmatpush1.msra.mxu0 0.0
    %419 = vmatprep.subr.mxu0 0.0
    %420 = vmatpush1.msra.mxu0 0.0
    %421 = vmatprep.subr.mxu0 0.0
    %422 = vmatpush1.msra.mxu0 0.0
    %423 = vmatprep.subr.mxu0 0.0
    %424 = vmatpush1.msra.mxu0 0.0
    %425 = vmatprep.subr.mxu0 0.0
    %426 = vmatpush1.msra.mxu0 0.0
    %427 = vmatprep.subr.mxu0 0.0
    %428 = vmatpush1.msra.mxu0 0.0
    %429 = vmatprep.subr.mxu0 0.0
    %430 = vmatpush1.msra.mxu0 0.0
    %431 = vmatprep.subr.mxu0 0.0
    %432 = vmatpush1.msra.mxu0 0.0
    %433 = vmatprep.subr.mxu0 0.0
    %434 = vmatpush1.msra.mxu0 0.0
    %435 = vmatprep.subr.mxu0 0.0
    %436 = vmatpush1.msra.mxu0 0.0
    %437 = vmatprep.subr.mxu0 0.0
    %438 = vmatpush1.msra.mxu0 0.0
    %439 = vmatprep.subr.mxu0 0.0
    %440 = vmatpush1.msra.mxu0 0.0
    %441 = vmatprep.subr.mxu0 0.0
    %442 = vmatpush1.msra.mxu0 0.0
    %443 = vmatprep.subr.mxu0 0.0
    %444 = vmatpush1.msra.mxu0 0.0
    %445 = vmatprep.subr.mxu0 0.0
    %446 = vmatpush1.msra.mxu0 0.0
    %447 = vmatprep.subr.mxu0 0.0
    %448 = vmatpush1.msra.mxu0 0.0
    %449 = vmatprep.mubr.f32.mxu0 0.0
    %450 = vmatmul.mubr.f32.gmra.mrb[0].mxu0 %v195
    %v451 = vpop.f32.mrb[0].mxu0
    %v452 = vadd.f32 %v382, %v451
    %v453 = vpop.f32.mrb[0].mxu0
    %454 = vdwg.mxu0
    %v455 = vld [vmem:[%s8] sm:$0x1]
    %v457 = vlaneseq
    %v458 = vshrl.u32 %v457, 7
    %v459 = vsub.s32 0, %v458
    %v460 = vrot.slane %v455, %v459
    %v462 = vadd.f32 %v452, %v460
    %463 = vst [vmem:[#allocation13] sm:$0xff] %v462
    // Predicated region
    $region62: #{tpu_custom_call.1} parent=1 // pred_check
      _
    $region63: #{tpu_custom_call.1} parent=1 // pred_check_branch
      %465 = sbr.rel (0) target = $region65
    $region64: #{tpu_custom_call.1} parent=1 // pred_region
      %s467 = ssub.s32 128, 128
      %468 = vsyncadd [#allocation4], %s467
      %s470 = sshll.u32 [#allocation13], 4
      %s471 = int_to_ptr.vmem [resolvable:$true] %s470
      %473 = dma.vmem_to_hbm [thread:$0]  %s471, 128, %s9, [#allocation4]
    $region65: #{tpu_custom_call.1} parent=1 // pred_fallthru
      _
    // Predicated region
    $region66: #{tpu_custom_call.1} parent=1 // pred_check
      _
    $region67: #{tpu_custom_call.1} parent=1 // pred_check_branch
      %475 = sbr.rel (0) target = $region69
    $region68: #{tpu_custom_call.1} parent=1 // pred_region
      %476 = dma.done [#allocation4], 128
    $region69: #{tpu_custom_call.1} parent=1 // pred_fallthru
      _
    %477 = vsyncpa [#allocation3], 1
    %478 = vsyncpa [#allocation6], 1
    %479 = vsyncpa [#allocation9], 1
    %480 = vsyncpa [#allocation12], 1
    %481 = vsyncpa [#allocation4], 1

</llo_original>
